<compile_context>
chip_gen: v6e
topology: v6e:2x2x1
jax: 0.10.0
libtpu: 0.0.40
codegen_flags: <defaults>
</compile_context>

<pallas_src>
import functools

import jax
import jax.numpy as jnp
from jax.experimental import pallas as pl
from jax.experimental.pallas import tpu as pltpu


def _action_head_kernel(x_ref, w1_ref, b1_ref, w2_ref, b2_ref, o_ref, acc_ref,
                        *, inv_mt):
    # x_ref:  (tile_n, tile_mt, D)   current slab of the (N, M*T, D) stream
    # w1_ref: (D, H)    b1_ref: (1, H)
    # w2_ref: (H, Kp)   b2_ref: (1, Kp)      (Kp = num_classes padded to 128)
    # o_ref:  (tile_n, Kp)                   lane-dense output tile
    # acc_ref:(tile_n, D) f32                pooled-sum accumulator (scratch)
    mt = pl.program_id(1)

    @pl.when(mt == 0)
    def _init():
        acc_ref[...] = jnp.zeros_like(acc_ref)

    # Pure VPU add per tile; f32 accumulation without up-casting the whole
    # (possibly bf16) input block.
    acc_ref[...] += jnp.sum(x_ref[...], axis=1, dtype=jnp.float32)

    @pl.when(mt == pl.num_programs(1) - 1)
    def _finalize():
        pooled = acc_ref[...] * inv_mt                       # (tile_n, D) f32
        h = jnp.dot(pooled.astype(w1_ref.dtype), w1_ref[...],
                    preferred_element_type=jnp.float32)
        h = jnp.maximum(h + b1_ref[...].astype(jnp.float32), 0.0)
        out = jnp.dot(h.astype(w2_ref.dtype), w2_ref[...],
                      preferred_element_type=jnp.float32)
        out = out + b2_ref[...].astype(jnp.float32)
        o_ref[...] = out.astype(o_ref.dtype)


def _pick_tile(total, quantum, target):
    """Largest multiple-of-`quantum` divisor of `total` that is <= target;
    falls back to the full extent (always a legal block size)."""
    if total <= quantum:
        return total
    best = None
    t = quantum
    while t <= min(total, target):
        if total % t == 0:
            best = t
        t += quantum
    return best if best is not None else total


def action_head_classification(feat, w1, b1, w2, b2, *, tile_n=None, tile_mt=None):
    """feat: (N, M, T, J, C); weights stored (in_features, out_features).
    Returns logits of shape (N, num_classes)."""
    N, M, T, J, C = feat.shape
    D = J * C
    H = w1.shape[1]
    K = w2.shape[1]
    MT = M * T

    # Glue: flatten (M, T) into one reduction axis and (J, C) into features.
    x = feat.reshape(N, MT, D)

    # Lane-dense fc2/output: zero-pad the class dim up to a multiple of 128.
    Kp = max(128, ((K + 127) // 128) * 128)
    w2p = jnp.zeros((H, Kp), w2.dtype).at[:, :K].set(w2)
    b2p = jnp.zeros((1, Kp), b2.dtype).at[0, :K].set(b2)
    b1_2d = b1.reshape(1, H)

    if tile_n is None:
        tile_n = _pick_tile(N, 8, 128)
    if tile_mt is None:
        tile_mt = _pick_tile(MT, 8, 512)
    assert N % tile_n == 0 and MT % tile_mt == 0

    grid = (N // tile_n, MT // tile_mt)
    out_dtype = jnp.promote_types(feat.dtype, w1.dtype)

    # VMEM budget: double-buffered x tile + weights (counted twice for safety)
    # + output tile + accumulator, with slack; capped below v7x's 64 MiB VMEM.
    x_bytes = 2 * tile_n * tile_mt * D * jnp.dtype(feat.dtype).itemsize
    w_bytes = 2 * ((D * H + H) * jnp.dtype(w1.dtype).itemsize
                   + (H * Kp + Kp) * jnp.dtype(w2.dtype).itemsize)
    out_bytes = 2 * max(tile_n, 8) * Kp * jnp.dtype(out_dtype).itemsize
    acc_bytes = max(tile_n, 8) * D * 4
    vmem_limit = int(min(max(x_bytes + w_bytes + out_bytes + acc_bytes + (4 << 20),
                             8 << 20), 48 << 20))

    kernel = functools.partial(_action_head_kernel, inv_mt=1.0 / float(MT))

    out = pl.pallas_call(
        kernel,
        out_shape=jax.ShapeDtypeStruct((N, Kp), out_dtype),
        grid_spec=pltpu.PrefetchScalarGridSpec(
            num_scalar_prefetch=0,
            grid=grid,
            in_specs=[
                # streamed input: tiles over (N, MT)
                pl.BlockSpec((tile_n, tile_mt, D), lambda i, k: (i, k, 0)),
                # weights/biases: constant index_maps -> fetched once, resident
                pl.BlockSpec((D, H), lambda i, k: (0, 0)),
                pl.BlockSpec((1, H), lambda i, k: (0, 0)),
                pl.BlockSpec((H, Kp), lambda i, k: (0, 0)),
                pl.BlockSpec((1, Kp), lambda i, k: (0, 0)),
            ],
            # same output block across the MT axis -> resident accumulator,
            # written back only after the last reduction step.
            out_specs=pl.BlockSpec((tile_n, Kp), lambda i, k: (i, 0)),
            scratch_shapes=[pltpu.VMEM((tile_n, D), jnp.float32)],
        ),
        compiler_params=pltpu.CompilerParams(
            dimension_semantics=("parallel", "arbitrary"),
            vmem_limit_bytes=vmem_limit,
        ),
    )(x, w1, b1_2d, w2p, b2p)

    return out[:, :K]


def _reference(feat, w1, b1, w2, b2):
    """Pure-JAX mirror of the PyTorch forward."""
    N, M, T, J, C = feat.shape
    f = jnp.transpose(feat, (0, 1, 3, 4, 2))      # (N, M, J, C, T)
    f = jnp.mean(f, axis=-1)                      # (N, M, J, C)
    f = f.reshape(N, M, -1)                       # (N, M, J*C)
    f = jnp.mean(f, axis=1)                       # (N, J*C)
    f = f @ w1 + b1
    f = jnp.maximum(f, 0.0)
    f = f @ w2 + b2
    return f


if __name__ == "__main__":
    # Small shapes consistent with the module's (N, M, T, J, C) convention.
    N, M, T, J, C = 2, 2, 8, 16, 32          # dim_rep=C=32, num_joints=J=16
    hidden_dim = 128
    num_classes = 8
    D = J * C

    key = jax.random.PRNGKey(0)
    k_feat, k_w1, k_b1, k_w2, k_b2 = jax.random.split(key, 5)

    feat = jax.random.normal(k_feat, (N, M, T, J, C), dtype=jnp.float32)
    # nn.Linear parameters, stored transposed: (in_features, out_features).
    w1 = jax.random.normal(k_w1, (D, hidden_dim), dtype=jnp.float32) * 0.02
    b1 = jax.random.normal(k_b1, (hidden_dim,), dtype=jnp.float32) * 0.01
    w2 = jax.random.normal(k_w2, (hidden_dim, num_classes), dtype=jnp.float32) * 0.02
    b2 = jax.random.normal(k_b2, (num_classes,), dtype=jnp.float32) * 0.01

    # tile_mt=8 -> two reduction steps over M*T=16, exercising the accumulator.
    out = action_head_classification(feat, w1, b1, w2, b2, tile_mt=8)
    out = jax.block_until_ready(out)

    ref = _reference(feat, w1, b1, w2, b2)
    assert out.shape == (N, num_classes)
    assert jnp.allclose(out, ref, atol=1e-4, rtol=1e-4)

    print("KERNEL_OK")
</pallas_src>

<mosaic_0001>
module attributes {stable_mosaic.version = 11 : i64} {
  func.func @_action_head_kernel(%arg0: i32, %arg1: i32, %arg2: memref<2x8x512xf32, #tpu.memory_space<vmem>>, %arg3: memref<512x128xf32, #tpu.memory_space<vmem>>, %arg4: memref<1x128xf32, #tpu.memory_space<vmem>>, %arg5: memref<128x128xf32, #tpu.memory_space<vmem>>, %arg6: memref<1x128xf32, #tpu.memory_space<vmem>>, %arg7: memref<2x128xf32, #tpu.memory_space<vmem>>, %arg8: memref<2x512xf32, #tpu.memory_space<vmem>>) attributes {dimension_semantics = [#tpu.dimension_semantics<parallel>, #tpu.dimension_semantics<arbitrary>], iteration_bounds = array<i64: 1, 2>, scalar_prefetch = 0 : i64, scratch_operands = 1 : i64, tpu.core_type = #tpu.core_type<tc>, window_params = [{transform_indices = @transform_0, window_bounds = array<i64: 2, 8, 512>}, {pipeline_mode = #tpu.pipeline_mode<synchronous>, transform_indices = @transform_1, window_bounds = array<i64: 512, 128>}, {pipeline_mode = #tpu.pipeline_mode<synchronous>, transform_indices = @transform_2, window_bounds = array<i64: 1, 128>}, {pipeline_mode = #tpu.pipeline_mode<synchronous>, transform_indices = @transform_3, window_bounds = array<i64: 128, 128>}, {pipeline_mode = #tpu.pipeline_mode<synchronous>, transform_indices = @transform_4, window_bounds = array<i64: 1, 128>}, {transform_indices = @transform_5, window_bounds = array<i64: 2, 128>}]} {
    %c0_i32 = arith.constant 0 : i32
    %0 = arith.cmpi eq, %arg1, %c0_i32 : i32
    %1 = arith.extui %0 : i1 to i32
    %c0_i32_0 = arith.constant 0 : i32
    %2 = arith.cmpi ne, %1, %c0_i32_0 : i32
    scf.if %2 {
      %cst_8 = arith.constant 0.000000e+00 : f32
      %11 = vector.broadcast %cst_8 : f32 to vector<2x512xf32>
      %c0_9 = arith.constant 0 : index
      %c0_10 = arith.constant 0 : index
      %12 = vector.load %arg8[%c0_9, %c0_10] : memref<2x512xf32, #tpu.memory_space<vmem>>, vector<2x512xf32>
      tpu.vector_store %arg8[%c0_9, %c0_10], %11 {strides = array<i32>} : memref<2x512xf32, #tpu.memory_space<vmem>>, vector<2x512xf32>,
    } else {
    }
    %c0 = arith.constant 0 : index
    %c0_1 = arith.constant 0 : index
    %3 = vector.load %arg8[%c0, %c0_1] : memref<2x512xf32, #tpu.memory_space<vmem>>, vector<2x512xf32>
    %c0_2 = arith.constant 0 : index
    %c0_3 = arith.constant 0 : index
    %c0_4 = arith.constant 0 : index
    %4 = vector.load %arg2[%c0_2, %c0_3, %c0_4] : memref<2x8x512xf32, #tpu.memory_space<vmem>>, vector<2x8x512xf32>
    %cst = arith.constant dense<0.000000e+00> : vector<2x512xf32>
    %5 = vector.multi_reduction <add>, %4, %cst [1] : vector<2x8x512xf32> to vector<2x512xf32>
    %6 = arith.addf %3, %5 : vector<2x512xf32>
    %c0_5 = arith.constant 0 : index
    %c0_6 = arith.constant 0 : index
    %7 = vector.load %arg8[%c0_5, %c0_6] : memref<2x512xf32, #tpu.memory_space<vmem>>, vector<2x512xf32>
    tpu.vector_store %arg8[%c0_5, %c0_6], %6 {strides = array<i32>} : memref<2x512xf32, #tpu.memory_space<vmem>>, vector<2x512xf32>,
    %c1_i32 = arith.constant 1 : i32
    %8 = arith.cmpi eq, %arg1, %c1_i32 : i32
    %9 = arith.extui %8 : i1 to i32
    %c0_i32_7 = arith.constant 0 : i32
    %10 = arith.cmpi ne, %9, %c0_i32_7 : i32
    scf.if %10 {
      %c0_8 = arith.constant 0 : index
      %c0_9 = arith.constant 0 : index
      %11 = vector.load %arg8[%c0_8, %c0_9] : memref<2x512xf32, #tpu.memory_space<vmem>>, vector<2x512xf32>
      %cst_10 = arith.constant 6.250000e-02 : f32
      %12 = vector.broadcast %cst_10 : f32 to vector<2x512xf32>
      %13 = arith.mulf %11, %12 : vector<2x512xf32>
      %c0_11 = arith.constant 0 : index
      %c0_12 = arith.constant 0 : index
      %14 = vector.load %arg3[%c0_11, %c0_12] : memref<512x128xf32, #tpu.memory_space<vmem>>, vector<512x128xf32>
      %cst_13 = arith.constant dense<0.000000e+00> : vector<2x128xf32>
      %15 = tpu.matmul %13, %14, %cst_13 {dimension_numbers = #tpu.dot_dimension_numbers<[1], [0], [0], [1], [0, 0, 1, 1], [], []>} : vector<2x512xf32>, vector<512x128xf32>, vector<2x128xf32> -> vector<2x128xf32>
      %c0_14 = arith.constant 0 : index
      %c0_15 = arith.constant 0 : index
      %16 = vector.load %arg4[%c0_14, %c0_15] : memref<1x128xf32, #tpu.memory_space<vmem>>, vector<1x128xf32>
      %17 = vector.broadcast %16 : vector<1x128xf32> to vector<2x128xf32>
      %18 = arith.addf %15, %17 : vector<2x128xf32>
      %cst_16 = arith.constant 0.000000e+00 : f32
      %19 = vector.broadcast %cst_16 : f32 to vector<2x128xf32>
      %20 = arith.maximumf %18, %19 : vector<2x128xf32>
      %c0_17 = arith.constant 0 : index
      %c0_18 = arith.constant 0 : index
      %21 = vector.load %arg5[%c0_17, %c0_18] : memref<128x128xf32, #tpu.memory_space<vmem>>, vector<128x128xf32>
      %cst_19 = arith.constant dense<0.000000e+00> : vector<2x128xf32>
      %22 = tpu.matmul %20, %21, %cst_19 {dimension_numbers = #tpu.dot_dimension_numbers<[1], [0], [0], [1], [0, 0, 1, 1], [], []>} : vector<2x128xf32>, vector<128x128xf32>, vector<2x128xf32> -> vector<2x128xf32>
      %c0_20 = arith.constant 0 : index
      %c0_21 = arith.constant 0 : index
      %23 = vector.load %arg6[%c0_20, %c0_21] : memref<1x128xf32, #tpu.memory_space<vmem>>, vector<1x128xf32>
      %24 = vector.broadcast %23 : vector<1x128xf32> to vector<2x128xf32>
      %25 = arith.addf %22, %24 : vector<2x128xf32>
      %c0_22 = arith.constant 0 : index
      %c0_23 = arith.constant 0 : index
      %26 = vector.load %arg7[%c0_22, %c0_23] : memref<2x128xf32, #tpu.memory_space<vmem>>, vector<2x128xf32>
      tpu.vector_store %arg7[%c0_22, %c0_23], %25 {strides = array<i32>} : memref<2x128xf32, #tpu.memory_space<vmem>>, vector<2x128xf32>,
    } else {
    }
    return
  }
  func.func @transform_0(%arg0: i32, %arg1: i32) -> (i32, i32, i32) {
    %c0_i32 = arith.constant 0 : i32
    %c0_i32_0 = arith.constant 0 : i32
    return %arg0, %arg1, %c0_i32 : i32, i32, i32
  }
  func.func @transform_1(%arg0: i32, %arg1: i32) -> (i32, i32) {
    %c0_i32 = arith.constant 0 : i32
    %c0_i32_0 = arith.constant 0 : i32
    %c0_i32_1 = arith.constant 0 : i32
    return %c0_i32, %c0_i32_0 : i32, i32
  }
  func.func @transform_2(%arg0: i32, %arg1: i32) -> (i32, i32) {
    %c0_i32 = arith.constant 0 : i32
    %c0_i32_0 = arith.constant 0 : i32
    %c0_i32_1 = arith.constant 0 : i32
    return %c0_i32, %c0_i32_0 : i32, i32
  }
  func.func @transform_3(%arg0: i32, %arg1: i32) -> (i32, i32) {
    %c0_i32 = arith.constant 0 : i32
    %c0_i32_0 = arith.constant 0 : i32
    %c0_i32_1 = arith.constant 0 : i32
    return %c0_i32, %c0_i32_0 : i32, i32
  }
  func.func @transform_4(%arg0: i32, %arg1: i32) -> (i32, i32) {
    %c0_i32 = arith.constant 0 : i32
    %c0_i32_0 = arith.constant 0 : i32
    %c0_i32_1 = arith.constant 0 : i32
    return %c0_i32, %c0_i32_0 : i32, i32
  }
  func.func @transform_5(%arg0: i32, %arg1: i32) -> (i32, i32) {
    %c0_i32 = arith.constant 0 : i32
    %c0_i32_0 = arith.constant 0 : i32
    return %arg0, %c0_i32 : i32, i32
  }
}

</mosaic_0001>

<llo_original>
// kernel: tpu_custom_call.1
$region0: #{tpu_custom_call.1}
  #allocation0 [shape = 'u32[]', space=smem, size = 0x4, offset = 0x4, fixed_abs, tag = 'smem constant byte address 0x4 - core index']
  #allocation1 [shape = 'u32[144,128]{1,0:T(1,128)}', space=vmem, size = 0x12000, scoped, tag = 'internal scratch']
  #allocation2 [shape = 'f32[2,512]{1,0:T(2,128)}', space=vmem, size = 0x1000, scoped, tag = 'scratch operand']
  %s0 = inlined_call_operand.hbm [shape: f32[2,16,512], index: 0, kind: input, shape index: {}]
  %s1 = inlined_call_operand.hbm [shape: f32[512,128], index: 1, kind: input, shape index: {}]
  %s2 = inlined_call_operand.vmem [shape: f32[1,128], index: 2, kind: input, shape index: {}]
  %s3 = inlined_call_operand.hbm [shape: f32[128,128], index: 3, kind: input, shape index: {}]
  %s4 = inlined_call_operand.vmem [shape: f32[1,128], index: 4, kind: input, shape index: {}]
  %s5 = inlined_call_operand.hbm [shape: f32[2,128], index: 5, kind: output, shape index: {}]
  %s6 = sld [smem:[#allocation0]]
  $region73: #{tpu_custom_call.1} parent=0
    _
  %s8 = ssub.s32 1, %s6
  %s9 = scalar_select 0, %s8, %s6
  $region1: #{tpu_custom_call.1} parent=0
    #allocation3 [shape = 'u8[65536]{0}', space=vmem, size = 0x10000, scoped, tag = 'input window, operand 0']
    #allocation4 [shape = 's32[2]{0}', space=sflag, size = 0x8, scoped, tag = 'scoped memory for tpu_custom_call.1']
    #allocation5 [shape = 's32[2]{0}', space=sflag, size = 0x8, scoped, tag = 'scoped memory for tpu_custom_call.1']
    #allocation6 [shape = 'u8[262144]{0}', space=vmem, size = 0x40000, scoped, tag = 'input window, operand 1, single buffered']
    #allocation7 [shape = 's32[1]{0}', space=sflag, size = 0x4, scoped, tag = 'scoped memory for tpu_custom_call.1']
    #allocation8 [shape = 'u8[65536]{0}', space=vmem, size = 0x10000, scoped, tag = 'input window, operand 3, single buffered']
    #allocation9 [shape = 'u8[1024]{0}', space=vmem, size = 0x400, scoped, tag = 'output window, operand 0, single buffered']
    %10 = vsyncpa [#allocation4], 0
    %s11 = scalar_lea.sflag [#allocation4], 1
    %12 = vsyncpa %s11, 0
    %13 = vsyncpa [#allocation7], 0
    %14 = vsyncpa [#allocation5], 0
    loop: start=0, step=1, limit=4
    $region2: #{tpu_custom_call.1} parent=1 // loop_pre_header
      _
    $region3: #{tpu_custom_call.1} parent=1 // loop_header
      %s16 = sphi 0, %s20
      %p17 = scmp.ge.s32.totalorder %s16, 4
      %s23 = sphi 0, %s35
      %s24 = sphi 0, %s31
      %s25 = sphi 0, %s23
      %s26 = sphi 0, %s24
      %s27 = sphi 0, %s25
      %s28 = sphi 0, %s26
      %s40 = sphi 0, %s42
      %s43 = sphi 0, %s40
      %s44 = sphi 0, %s43
      %s60 = sphi 0, %s44
      %s64 = sphi 0, %s64
      %s66 = sphi 0, %s64
      %s67 = sphi 0, %s66
      %s81 = sphi 0, %s67
      %s85 = sphi 0, %s85
      %s87 = sphi 0, %s85
      %s88 = sphi 0, %s87
      %s102 = sphi 0, %s88
      %s106 = sphi 0, %s106
      %s108 = sphi 0, %s106
      %s109 = sphi 0, %s108
      %s123 = sphi 0, %s109
      %s127 = sphi 0, %s127
      %s129 = sphi 0, %s127
      %s130 = sphi 0, %s129
      %s144 = sphi 0, %s130
      %s150 = sphi 0, %s152
      %s153 = sphi 0, %s150
      %s154 = sphi 0, %s153
      %s170 = sphi 0, %s154
    $region4: #{tpu_custom_call.1} parent=1 // loop_header_branch
      %19 = sbr.rel (%p17) target = $region8
    $region5: #{tpu_custom_call.1} parent=1 // loop_body
      %s21 = ssub.s32 %s16, 1
      %s22 = ssub.s32 %s16, 2
      %s29 = sadd.s32 1, %s24
      %p30 = scmp.ge.s32.totalorder %s29, 2
      %s31 = scalar_select %p30, 0, %s29
      %s32 = sadd.s32 1, %s23
      %s33 = scalar_select %p30, %s32, %s23
      %p34 = scmp.ge.s32.totalorder %s33, 1
      %s35 = scalar_select %p34, 0, %s33
      %s36 = ssub.s32 %s23, %s35
      %s37 = ssub.s32 %s24, %s31
      %s38 = sor.u32 %s36, %s37
      %p39 = scmp.eq.s32.totalorder %s38, 0
      %s41 = sadd.s32 %s40, 1
      %s42 = scalar_select %p39, %s40, %s41
      %p45 = pneg %p39
      %p46 = scmp.eq.s32.totalorder %s16, 1
      %p47 = por %p45, %p46
      %p48 = scmp.ne.s32.totalorder %s40, %s43
      %p49 = scmp.eq.s32.totalorder %s16, 0
      %p50 = por %p48, %p49
      %p51 = scmp.ne.s32.totalorder %s40, %s43
      %p52 = scmp.eq.s32.totalorder %s21, 1
      %p53 = por %p51, %p52
      %p54 = scmp.ne.s32.totalorder %s43, %s44
      %p55 = scmp.eq.s32.totalorder %s21, 0
      %p56 = por %p54, %p55
      %p57 = scmp.ne.s32.totalorder %s43, %s44
      %p58 = scmp.eq.s32.totalorder %s22, 1
      %p59 = por %p57, %p58
      %p61 = scmp.ne.s32.totalorder %s44, %s60
      %p62 = scmp.eq.s32.totalorder %s22, 0
      %p63 = por %p61, %p62
      %s65 = sadd.s32 %s64, 1
      %p68 = scmp.eq.s32.totalorder %s16, 1
      %p69 = scmp.ne.s32.totalorder %s64, %s66
      %p70 = scmp.eq.s32.totalorder %s16, 0
      %p71 = por %p69, %p70
      %p72 = scmp.ne.s32.totalorder %s64, %s66
      %p73 = scmp.eq.s32.totalorder %s21, 1
      %p74 = por %p72, %p73
      %p75 = scmp.ne.s32.totalorder %s66, %s67
      %p76 = scmp.eq.s32.totalorder %s21, 0
      %p77 = por %p75, %p76
      %p78 = scmp.ne.s32.totalorder %s66, %s67
      %p79 = scmp.eq.s32.totalorder %s22, 1
      %p80 = por %p78, %p79
      %p82 = scmp.ne.s32.totalorder %s67, %s81
      %p83 = scmp.eq.s32.totalorder %s22, 0
      %p84 = por %p82, %p83
      %s86 = sadd.s32 %s85, 1
      %p89 = scmp.eq.s32.totalorder %s16, 1
      %p90 = scmp.ne.s32.totalorder %s85, %s87
      %p91 = scmp.eq.s32.totalorder %s16, 0
      %p92 = por %p90, %p91
      %p93 = scmp.ne.s32.totalorder %s85, %s87
      %p94 = scmp.eq.s32.totalorder %s21, 1
      %p95 = por %p93, %p94
      %p96 = scmp.ne.s32.totalorder %s87, %s88
      %p97 = scmp.eq.s32.totalorder %s21, 0
      %p98 = por %p96, %p97
      %p99 = scmp.ne.s32.totalorder %s87, %s88
      %p100 = scmp.eq.s32.totalorder %s22, 1
      %p101 = por %p99, %p100
      %p103 = scmp.ne.s32.totalorder %s88, %s102
      %p104 = scmp.eq.s32.totalorder %s22, 0
      %p105 = por %p103, %p104
      %s107 = sadd.s32 %s106, 1
      %p110 = scmp.eq.s32.totalorder %s16, 1
      %p111 = scmp.ne.s32.totalorder %s106, %s108
      %p112 = scmp.eq.s32.totalorder %s16, 0
      %p113 = por %p111, %p112
      %p114 = scmp.ne.s32.totalorder %s106, %s108
      %p115 = scmp.eq.s32.totalorder %s21, 1
      %p116 = por %p114, %p115
      %p117 = scmp.ne.s32.totalorder %s108, %s109
      %p118 = scmp.eq.s32.totalorder %s21, 0
      %p119 = por %p117, %p118
      %p120 = scmp.ne.s32.totalorder %s108, %s109
      %p121 = scmp.eq.s32.totalorder %s22, 1
      %p122 = por %p120, %p121
      %p124 = scmp.ne.s32.totalorder %s109, %s123
      %p125 = scmp.eq.s32.totalorder %s22, 0
      %p126 = por %p124, %p125
      %s128 = sadd.s32 %s127, 1
      %p131 = scmp.eq.s32.totalorder %s16, 1
      %p132 = scmp.ne.s32.totalorder %s127, %s129
      %p133 = scmp.eq.s32.totalorder %s16, 0
      %p134 = por %p132, %p133
      %p135 = scmp.ne.s32.totalorder %s127, %s129
      %p136 = scmp.eq.s32.totalorder %s21, 1
      %p137 = por %p135, %p136
      %p138 = scmp.ne.s32.totalorder %s129, %s130
      %p139 = scmp.eq.s32.totalorder %s21, 0
      %p140 = por %p138, %p139
      %p141 = scmp.ne.s32.totalorder %s129, %s130
      %p142 = scmp.eq.s32.totalorder %s22, 1
      %p143 = por %p141, %p142
      %p145 = scmp.ne.s32.totalorder %s130, %s144
      %p146 = scmp.eq.s32.totalorder %s22, 0
      %p147 = por %p145, %p146
      %s148 = ssub.s32 %s23, %s35
      %p149 = scmp.eq.s32.totalorder %s148, 0
      %s151 = sadd.s32 %s150, 1
      %s152 = scalar_select %p149, %s150, %s151
      %p155 = pneg %p149
      %p156 = scmp.eq.s32.totalorder %s16, 1
      %p157 = por %p155, %p156
      %p158 = scmp.ne.s32.totalorder %s150, %s153
      %p159 = scmp.eq.s32.totalorder %s16, 0
      %p160 = por %p158, %p159
      %p161 = scmp.ne.s32.totalorder %s150, %s153
      %p162 = scmp.eq.s32.totalorder %s21, 1
      %p163 = por %p161, %p162
      %p164 = scmp.ne.s32.totalorder %s153, %s154
      %p165 = scmp.eq.s32.totalorder %s21, 0
      %p166 = por %p164, %p165
      %p167 = scmp.ne.s32.totalorder %s153, %s154
      %p168 = scmp.eq.s32.totalorder %s22, 1
      %p169 = por %p167, %p168
      %p171 = scmp.ne.s32.totalorder %s154, %s170
      %p172 = scmp.eq.s32.totalorder %s22, 0
      %p173 = por %p171, %p172
      %p174 = scmp.le.s32.totalorder 1, %s16
      %p175 = scmp.lt.s32.totalorder %s16, 3
      %p176 = pnand %p174, %p175
      %p177 = pneg %p176
      // Predicated region
      $region9: #{tpu_custom_call.1} parent=5 // pred_check
        _
      $region10: #{tpu_custom_call.1} parent=5 // pred_check_branch
        %179 = sbr.rel (%p176) target = $region12
      $region11: #{tpu_custom_call.1} parent=5 // pred_region
        %s180 = ssub.s32 %s16, 1
        // Predicated region
        $region13: #{tpu_custom_call.1} parent=11 // pred_check
          %p181 = pneg %p77
        $region14: #{tpu_custom_call.1} parent=11 // pred_check_branch
          %183 = sbr.rel (%p181) target = $region16
        $region15: #{tpu_custom_call.1} parent=11 // pred_region
          %s185 = ssub.s32 8192, 8192
          %186 = vsyncadd [#allocation7], %s185
          %s187 = sshll.u32 [#allocation6], 4
          %s188 = int_to_ptr.vmem [resolvable:$true] %s187
          %193 = dma.hbm_to_vmem [thread:$0]  %s1, 8192, %s188, [#allocation7], 128, 128, 8
        $region16: #{tpu_custom_call.1} parent=11 // pred_fallthru
          _
        // Predicated region
        $region17: #{tpu_custom_call.1} parent=11 // pred_check
          %p194 = pneg %p98
        $region18: #{tpu_custom_call.1} parent=11 // pred_check_branch
          %196 = sbr.rel (%p194) target = $region20
        $region19: #{tpu_custom_call.1} parent=11 // pred_region
          _
        $region20: #{tpu_custom_call.1} parent=11 // pred_fallthru
          _
        // Predicated region
        $region21: #{tpu_custom_call.1} parent=11 // pred_check
          %p197 = pneg %p119
        $region22: #{tpu_custom_call.1} parent=11 // pred_check_branch
          %199 = sbr.rel (%p197) target = $region24
        $region23: #{tpu_custom_call.1} parent=11 // pred_region
          %s201 = ssub.s32 2048, 2048
          %202 = vsyncadd [#allocation7], %s201
          %s203 = sshll.u32 [#allocation8], 4
          %s204 = int_to_ptr.vmem [resolvable:$true] %s203
          %209 = dma.hbm_to_vmem [thread:$0]  %s3, 2048, %s204, [#allocation7], 128, 128, 8
        $region24: #{tpu_custom_call.1} parent=11 // pred_fallthru
          _
        // Predicated region
        $region25: #{tpu_custom_call.1} parent=11 // pred_check
          %p210 = pneg %p140
        $region26: #{tpu_custom_call.1} parent=11 // pred_check_branch
          %212 = sbr.rel (%p210) target = $region28
        $region27: #{tpu_custom_call.1} parent=11 // pred_region
          _
        $region28: #{tpu_custom_call.1} parent=11 // pred_fallthru
          _
      $region12: #{tpu_custom_call.1} parent=5 // pred_fallthru
        _
      %p213 = scmp.lt.s32.totalorder %s16, 2
      // Predicated region
      $region29: #{tpu_custom_call.1} parent=5 // pred_check
        %p214 = pneg %p213
      $region30: #{tpu_custom_call.1} parent=5 // pred_check_branch
        %216 = sbr.rel (%p214) target = $region32
      $region31: #{tpu_custom_call.1} parent=5 // pred_region
        // Predicated region
        $region33: #{tpu_custom_call.1} parent=31 // pred_check
          %p217 = pneg %p50
        $region34: #{tpu_custom_call.1} parent=31 // pred_check_branch
          %219 = sbr.rel (%p217) target = $region36
        $region35: #{tpu_custom_call.1} parent=31 // pred_region
          %s220 = sand.u32 %s40, 1
          %s221 = scalar_lea.sflag [#allocation4], %s220
          %s222 = sand.u32 %s40, 1
          %s223 = smul.addr %s222, 64
          %s224 = scalar_lea.vmem [#allocation3], %s223
          %s225 = smul.u32 2, %s23
          %s227 = ssub.s32 1024, 1024
          %228 = vsyncadd %s221, %s227
          %s229 = smul.addr %s24, 4
          %s230 = smul.addr %s225, 8
          %s231 = sadd.s32 %s229, %s230
          %s232 = smul.addr %s231, 128
          %s233 = scalar_lea.hbm %s0, %s232
          %s234 = sshll.u32 %s224, 4
          %s235 = int_to_ptr.vmem [resolvable:$true] %s234
          %240 = dma.hbm_to_vmem [thread:$0]  %s233, 1024, %s235, %s221, 1024, 512, 32
        $region36: #{tpu_custom_call.1} parent=31 // pred_fallthru
          _
      $region32: #{tpu_custom_call.1} parent=5 // pred_fallthru
        _
      %p241 = scmp.le.s32.totalorder 1, %s16
      %p242 = scmp.lt.s32.totalorder %s16, 3
      %p243 = pnand %p241, %p242
      %p244 = pneg %p243
      // Predicated region
      $region37: #{tpu_custom_call.1} parent=5 // pred_check
        _
      $region38: #{tpu_custom_call.1} parent=5 // pred_check_branch
        %246 = sbr.rel (%p243) target = $region40
      $region39: #{tpu_custom_call.1} parent=5 // pred_region
        %s247 = ssub.s32 %s16, 1
        %s248 = sand.u32 %s43, 1
        %s249 = scalar_lea.sflag [#allocation4], %s248
        %s250 = sand.u32 %s43, 1
        %s251 = smul.addr %s250, 64
        %s252 = scalar_lea.vmem [#allocation3], %s251
        // Predicated region
        $region41: #{tpu_custom_call.1} parent=39 // pred_check
          %p253 = pneg %p56
        $region42: #{tpu_custom_call.1} parent=39 // pred_check_branch
          %255 = sbr.rel (%p253) target = $region44
        $region43: #{tpu_custom_call.1} parent=39 // pred_region
          %256 = dma.done %s249, 1024
        $region44: #{tpu_custom_call.1} parent=39 // pred_fallthru
          _
        // Predicated region
        $region45: #{tpu_custom_call.1} parent=39 // pred_check
          %p257 = pneg %p77
        $region46: #{tpu_custom_call.1} parent=39 // pred_check_branch
          %259 = sbr.rel (%p257) target = $region48
        $region47: #{tpu_custom_call.1} parent=39 // pred_region
          %260 = dma.done [#allocation7], 8192
        $region48: #{tpu_custom_call.1} parent=39 // pred_fallthru
          _
        // Predicated region
        $region49: #{tpu_custom_call.1} parent=39 // pred_check
          %p261 = pneg %p119
        $region50: #{tpu_custom_call.1} parent=39 // pred_check_branch
          %263 = sbr.rel (%p261) target = $region52
        $region51: #{tpu_custom_call.1} parent=39 // pred_region
          %264 = dma.done [#allocation7], 2048
        $region52: #{tpu_custom_call.1} parent=39 // pred_fallthru
          _
        %s265 = sand.u32 %s43, 1
        %s266 = scalar_lea.sflag [#allocation4], %s265
        %s267 = sand.u32 %s43, 1
        %s268 = smul.addr %s267, 64
        %s269 = scalar_lea.vmem [#allocation3], %s268
        %p270 = pneg %p56
        %p271 = pneg %p53
        %p272 = pneg %p77
        %p273 = pneg %p74
        %p274 = pneg %p98
        %p275 = pneg %p95
        %p276 = pneg %p119
        %p277 = pneg %p116
        %p278 = pneg %p140
        %p279 = pneg %p137
        %p280 = pneg %p166
        %p281 = pneg %p163
        %s282 = smul.u32 2, %s25
        %p283 = scmp.eq.s32.totalorder %s26, 0
        // Predicated region
        $region53: #{tpu_custom_call.1} parent=39 // pred_check
          %p284 = pneg %p283
        $region54: #{tpu_custom_call.1} parent=39 // pred_check_branch
          %286 = sbr.rel (%p284) target = $region56
        $region55: #{tpu_custom_call.1} parent=39 // pred_region
          %287 = vst [vmem:[#allocation2] sm:$0xff] 0.0
        $region56: #{tpu_custom_call.1} parent=39 // pred_fallthru
          _
        %v288 = vld [vmem:[#allocation2] sm:$0xff]
        %v289 = vld [vmem:[%s252] sm:$0xff]
        %v290 = vld [vmem:[%s252 + $0x8] sm:$0xff]
        %v291 = vld [vmem:[%s252 + $0x10] sm:$0xff]
        %v292 = vld [vmem:[%s252 + $0x18] sm:$0xff]
        %v293 = vld [vmem:[%s252 + $0x20] sm:$0xff]
        %v294 = vld [vmem:[%s252 + $0x28] sm:$0xff]
        %v295 = vld [vmem:[%s252 + $0x30] sm:$0xff]
        %v296 = vld [vmem:[%s252 + $0x38] sm:$0xff]
        %v297 = vrot.slane %v289, 4
        %v298 = vadd.f32 %v289, %v297
        %v299 = vrot.slane %v298, 2
        %v300 = vadd.f32 %v298, %v299
        %v301 = vrot.slane %v300, 1
        %v302 = vadd.f32 %v300, %v301
        %v303 = vrot.slane %v290, 4
        %v304 = vadd.f32 %v290, %v303
        %v305 = vrot.slane %v304, 2
        %v306 = vadd.f32 %v304, %v305
        %v307 = vrot.slane %v306, 1
        %v308 = vadd.f32 %v306, %v307
        %v309 = vrot.slane %v291, 4
        %v310 = vadd.f32 %v291, %v309
        %v311 = vrot.slane %v310, 2
        %v312 = vadd.f32 %v310, %v311
        %v313 = vrot.slane %v312, 1
        %v314 = vadd.f32 %v312, %v313
        %v315 = vrot.slane %v292, 4
        %v316 = vadd.f32 %v292, %v315
        %v317 = vrot.slane %v316, 2
        %v318 = vadd.f32 %v316, %v317
        %v319 = vrot.slane %v318, 1
        %v320 = vadd.f32 %v318, %v319
        %v321 = vrot.slane %v293, 4
        %v322 = vadd.f32 %v293, %v321
        %v323 = vrot.slane %v322, 2
        %v324 = vadd.f32 %v322, %v323
        %v325 = vrot.slane %v324, 1
        %v326 = vadd.f32 %v324, %v325
        %v327 = vrot.slane %v294, 4
        %v328 = vadd.f32 %v294, %v327
        %v329 = vrot.slane %v328, 2
        %v330 = vadd.f32 %v328, %v329
        %v331 = vrot.slane %v330, 1
        %v332 = vadd.f32 %v330, %v331
        %v333 = vrot.slane %v295, 4
        %v334 = vadd.f32 %v295, %v333
        %v335 = vrot.slane %v334, 2
        %v336 = vadd.f32 %v334, %v335
        %v337 = vrot.slane %v336, 1
        %v338 = vadd.f32 %v336, %v337
        %v339 = vrot.slane %v296, 4
        %v340 = vadd.f32 %v296, %v339
        %v341 = vrot.slane %v340, 2
        %v342 = vadd.f32 %v340, %v341
        %v343 = vrot.slane %v342, 1
        %v344 = vadd.f32 %v342, %v343
        %v353 = vcombine.low %v302, %v308
        %v354 = vcombine.low %v314, %v320
        %v356 = vunpack.c.l.s4 1983009808
        %v357 = vunpack.c.0.s8 %v356
        %v358 = vlaneseq
        %v359 = vshrl.u32 %v358, 7
        %v360 = vsub.s32 %v357, %v359
        %v361 = vrot.slane %v353, %v360
        %v363 = vunpack.c.l.s4 1983009808
        %v364 = vunpack.c.0.s8 %v363
        %v365 = vlaneseq
        %v366 = vshrl.u32 %v365, 7
        %v367 = vsub.s32 %v364, %v366
        %v368 = vrot.slane %v354, %v367
        %v369 = vcombine.low %v361, %v368
        %v370 = vcombine.low %v326, %v332
        %v371 = vcombine.low %v338, %v344
        %v373 = vunpack.c.l.s4 1983009808
        %v374 = vunpack.c.0.s8 %v373
        %v375 = vlaneseq
        %v376 = vshrl.u32 %v375, 7
        %v377 = vsub.s32 %v374, %v376
        %v378 = vrot.slane %v370, %v377
        %v380 = vunpack.c.l.s4 1983009808
        %v381 = vunpack.c.0.s8 %v380
        %v382 = vlaneseq
        %v383 = vshrl.u32 %v382, 7
        %v384 = vsub.s32 %v381, %v383
        %v385 = vrot.slane %v371, %v384
        %v386 = vcombine.low %v378, %v385
        %vm387 = vcmask 1044484
        %v388 = vsel %vm387, %v369, %v369
        %vm389 = vcmask 1046534
        %v390 = vsel %vm389, %v369, %v388
        %v391 = vrot.slane %v386, 7
        %vm392 = vcmask 1041409
        %v393 = vsel %vm392, %v391, %v390
        %vm394 = vcmask 1043459
        %v395 = vsel %vm394, %v391, %v393
        %vm396 = vcmask 1045509
        %v397 = vsel %vm396, %v391, %v395
        %vm398 = vcmask 1047559
        %v399 = vsel %vm398, %v391, %v397
        %v401 = vadd.f32 %v288, %v399
        %402 = vst [vmem:[#allocation2] sm:$0xff] %v401
        %p403 = scmp.eq.s32.totalorder %s26, 1
        // Predicated region
        $region57: #{tpu_custom_call.1} parent=39 // pred_check
          %p404 = pneg %p403
        $region58: #{tpu_custom_call.1} parent=39 // pred_check_branch
          %406 = sbr.rel (%p404) target = $region60
        $region59: #{tpu_custom_call.1} parent=39 // pred_region
          %v407 = vld [vmem:[#allocation2] sm:$0xff]
          %v408 = vmul.f32 %v407, 0.0625
          %v409 = vld [vmem:[#allocation6] sm:$0xff]
          %v410 = vld [vmem:[#allocation6 + $0x8] sm:$0xff]
          %v411 = vld [vmem:[#allocation6 + $0x10] sm:$0xff]
          %v412 = vld [vmem:[#allocation6 + $0x18] sm:$0xff]
          %v413 = vld [vmem:[#allocation6 + $0x20] sm:$0xff]
          %v414 = vld [vmem:[#allocation6 + $0x28] sm:$0xff]
          %v415 = vld [vmem:[#allocation6 + $0x30] sm:$0xff]
          %v416 = vld [vmem:[#allocation6 + $0x38] sm:$0xff]
          %v417 = vld [vmem:[#allocation6 + $0x40] sm:$0xff]
          %v418 = vld [vmem:[#allocation6 + $0x48] sm:$0xff]
          %v419 = vld [vmem:[#allocation6 + $0x50] sm:$0xff]
          %v420 = vld [vmem:[#allocation6 + $0x58] sm:$0xff]
          %v421 = vld [vmem:[#allocation6 + $0x60] sm:$0xff]
          %v422 = vld [vmem:[#allocation6 + $0x68] sm:$0xff]
          %v423 = vld [vmem:[#allocation6 + $0x70] sm:$0xff]
          %v424 = vld [vmem:[#allocation6 + $0x78] sm:$0xff]
          %v425 = vld [vmem:[#allocation6 + $0x80] sm:$0xff]
          %v426 = vld [vmem:[#allocation6 + $0x88] sm:$0xff]
          %v427 = vld [vmem:[#allocation6 + $0x90] sm:$0xff]
          %v428 = vld [vmem:[#allocation6 + $0x98] sm:$0xff]
          %v429 = vld [vmem:[#allocation6 + $0xa0] sm:$0xff]
          %v430 = vld [vmem:[#allocation6 + $0xa8] sm:$0xff]
          %v431 = vld [vmem:[#allocation6 + $0xb0] sm:$0xff]
          %v432 = vld [vmem:[#allocation6 + $0xb8] sm:$0xff]
          %v433 = vld [vmem:[#allocation6 + $0xc0] sm:$0xff]
          %v434 = vld [vmem:[#allocation6 + $0xc8] sm:$0xff]
          %v435 = vld [vmem:[#allocation6 + $0xd0] sm:$0xff]
          %v436 = vld [vmem:[#allocation6 + $0xd8] sm:$0xff]
          %v437 = vld [vmem:[#allocation6 + $0xe0] sm:$0xff]
          %v438 = vld [vmem:[#allocation6 + $0xe8] sm:$0xff]
          %v439 = vld [vmem:[#allocation6 + $0xf0] sm:$0xff]
          %v440 = vld [vmem:[#allocation6 + $0xf8] sm:$0xff]
          %v441 = vld [vmem:[#allocation6 + $0x100] sm:$0xff]
          %v442 = vld [vmem:[#allocation6 + $0x108] sm:$0xff]
          %v443 = vld [vmem:[#allocation6 + $0x110] sm:$0xff]
          %v444 = vld [vmem:[#allocation6 + $0x118] sm:$0xff]
          %v445 = vld [vmem:[#allocation6 + $0x120] sm:$0xff]
          %v446 = vld [vmem:[#allocation6 + $0x128] sm:$0xff]
          %v447 = vld [vmem:[#allocation6 + $0x130] sm:$0xff]
          %v448 = vld [vmem:[#allocation6 + $0x138] sm:$0xff]
          %v449 = vld [vmem:[#allocation6 + $0x140] sm:$0xff]
          %v450 = vld [vmem:[#allocation6 + $0x148] sm:$0xff]
          %v451 = vld [vmem:[#allocation6 + $0x150] sm:$0xff]
          %v452 = vld [vmem:[#allocation6 + $0x158] sm:$0xff]
          %v453 = vld [vmem:[#allocation6 + $0x160] sm:$0xff]
          %v454 = vld [vmem:[#allocation6 + $0x168] sm:$0xff]
          %v455 = vld [vmem:[#allocation6 + $0x170] sm:$0xff]
          %v456 = vld [vmem:[#allocation6 + $0x178] sm:$0xff]
          %v457 = vld [vmem:[#allocation6 + $0x180] sm:$0xff]
          %v458 = vld [vmem:[#allocation6 + $0x188] sm:$0xff]
          %v459 = vld [vmem:[#allocation6 + $0x190] sm:$0xff]
          %v460 = vld [vmem:[#allocation6 + $0x198] sm:$0xff]
          %v461 = vld [vmem:[#allocation6 + $0x1a0] sm:$0xff]
          %v462 = vld [vmem:[#allocation6 + $0x1a8] sm:$0xff]
          %v463 = vld [vmem:[#allocation6 + $0x1b0] sm:$0xff]
          %v464 = vld [vmem:[#allocation6 + $0x1b8] sm:$0xff]
          %v465 = vld [vmem:[#allocation6 + $0x1c0] sm:$0xff]
          %v466 = vld [vmem:[#allocation6 + $0x1c8] sm:$0xff]
          %v467 = vld [vmem:[#allocation6 + $0x1d0] sm:$0xff]
          %v468 = vld [vmem:[#allocation6 + $0x1d8] sm:$0xff]
          %v469 = vld [vmem:[#allocation6 + $0x1e0] sm:$0xff]
          %v470 = vld [vmem:[#allocation6 + $0x1e8] sm:$0xff]
          %v471 = vld [vmem:[#allocation6 + $0x1f0] sm:$0xff]
          %v472 = vld [vmem:[#allocation6 + $0x1f8] sm:$0xff]
          %v473 = vld [vmem:[%s2] sm:$0x1]
          %v475 = vlaneseq
          %v476 = vshrl.u32 %v475, 7
          %v477 = vsub.s32 0, %v476
          %v478 = vrot.slane %v473, %v477
          %v481 = vcombine.high %v408, %v408
          %v483 = vunpack.c.l.s4 1983009808
          %v484 = vunpack.c.0.s8 %v483
          %v485 = vlaneseq
          %v486 = vshrl.u32 %v485, 7
          %v487 = vsub.s32 %v484, %v486
          %v488 = vrot.slane %v408, %v487
          %v490 = vunpack.c.l.s4 1983009808
          %v491 = vunpack.c.0.s8 %v490
          %v492 = vlaneseq
          %v493 = vshrl.u32 %v492, 7
          %v494 = vsub.s32 %v491, %v493
          %v495 = vrot.slane %v481, %v494
          %v496 = vcombine.high %v488, %v488
          %v497 = vcombine.high %v495, %v495
          %502 = vmatprep.subr.mxu0 0.0
          %503 = vmatpush1.msra.mxu0 %v424
          %504 = vmatprep.subr.mxu0 0.0
          %505 = vmatpush1.msra.mxu0 %v423
          %506 = vmatprep.subr.mxu0 0.0
          %507 = vmatpush1.msra.mxu0 %v422
          %508 = vmatprep.subr.mxu0 0.0
          %509 = vmatpush1.msra.mxu0 %v421
          %510 = vmatprep.subr.mxu0 0.0
          %511 = vmatpush1.msra.mxu0 %v420
          %512 = vmatprep.subr.mxu0 0.0
          %513 = vmatpush1.msra.mxu0 %v419
          %514 = vmatprep.subr.mxu0 0.0
          %515 = vmatpush1.msra.mxu0 %v418
          %516 = vmatprep.subr.mxu0 0.0
          %517 = vmatpush1.msra.mxu0 %v417
          %518 = vmatprep.subr.mxu0 0.0
          %519 = vmatpush1.msra.mxu0 %v416
          %520 = vmatprep.subr.mxu0 0.0
          %521 = vmatpush1.msra.mxu0 %v415
          %522 = vmatprep.subr.mxu0 0.0
          %523 = vmatpush1.msra.mxu0 %v414
          %524 = vmatprep.subr.mxu0 0.0
          %525 = vmatpush1.msra.mxu0 %v413
          %526 = vmatprep.subr.mxu0 0.0
          %527 = vmatpush1.msra.mxu0 %v412
          %528 = vmatprep.subr.mxu0 0.0
          %529 = vmatpush1.msra.mxu0 %v411
          %530 = vmatprep.subr.mxu0 0.0
          %531 = vmatpush1.msra.mxu0 %v410
          %532 = vmatprep.subr.mxu0 0.0
          %533 = vmatpush1.msra.mxu0 %v409
          %534 = vmatprep.subr.mxu0 0.0
          %535 = vmatpush2.msra.mxu0 %v440
          %536 = vmatprep.subr.mxu0 0.0
          %537 = vmatpush2.msra.mxu0 %v439
          %538 = vmatprep.subr.mxu0 0.0
          %539 = vmatpush2.msra.mxu0 %v438
          %540 = vmatprep.subr.mxu0 0.0
          %541 = vmatpush2.msra.mxu0 %v437
          %542 = vmatprep.subr.mxu0 0.0
          %543 = vmatpush2.msra.mxu0 %v436
          %544 = vmatprep.subr.mxu0 0.0
          %545 = vmatpush2.msra.mxu0 %v435
          %546 = vmatprep.subr.mxu0 0.0
          %547 = vmatpush2.msra.mxu0 %v434
          %548 = vmatprep.subr.mxu0 0.0
          %549 = vmatpush2.msra.mxu0 %v433
          %550 = vmatprep.subr.mxu0 0.0
          %551 = vmatpush2.msra.mxu0 %v432
          %552 = vmatprep.subr.mxu0 0.0
          %553 = vmatpush2.msra.mxu0 %v431
          %554 = vmatprep.subr.mxu0 0.0
          %555 = vmatpush2.msra.mxu0 %v430
          %556 = vmatprep.subr.mxu0 0.0
          %557 = vmatpush2.msra.mxu0 %v429
          %558 = vmatprep.subr.mxu0 0.0
          %559 = vmatpush2.msra.mxu0 %v428
          %560 = vmatprep.subr.mxu0 0.0
          %561 = vmatpush2.msra.mxu0 %v427
          %562 = vmatprep.subr.mxu0 0.0
          %563 = vmatpush2.msra.mxu0 %v426
          %564 = vmatprep.subr.mxu0 0.0
          %565 = vmatpush2.msra.mxu0 %v425
          %566 = vmatprep.mubr.f32.mxu0 %v496
          %567 = vmatmul.mubr.f32.gmra.mxu0 %v488
          %v568 = vpop.f32.mrf.mxu0
          %v569 = vadd.f32 %v478, %v568
          %v570 = vpop.f32.mrf.mxu0
          %571 = vdwg.mxu0
          %572 = vmatprep.subr.mxu0 0.0
          %573 = vmatpush1.msra.mxu0 %v456
          %574 = vmatprep.subr.mxu0 0.0
          %575 = vmatpush1.msra.mxu0 %v455
          %576 = vmatprep.subr.mxu0 0.0
          %577 = vmatpush1.msra.mxu0 %v454
          %578 = vmatprep.subr.mxu0 0.0
          %579 = vmatpush1.msra.mxu0 %v453
          %580 = vmatprep.subr.mxu0 0.0
          %581 = vmatpush1.msra.mxu0 %v452
          %582 = vmatprep.subr.mxu0 0.0
          %583 = vmatpush1.msra.mxu0 %v451
          %584 = vmatprep.subr.mxu0 0.0
          %585 = vmatpush1.msra.mxu0 %v450
          %586 = vmatprep.subr.mxu0 0.0
          %587 = vmatpush1.msra.mxu0 %v449
          %588 = vmatprep.subr.mxu0 0.0
          %589 = vmatpush1.msra.mxu0 %v448
          %590 = vmatprep.subr.mxu0 0.0
          %591 = vmatpush1.msra.mxu0 %v447
          %592 = vmatprep.subr.mxu0 0.0
          %593 = vmatpush1.msra.mxu0 %v446
          %594 = vmatprep.subr.mxu0 0.0
          %595 = vmatpush1.msra.mxu0 %v445
          %596 = vmatprep.subr.mxu0 0.0
          %597 = vmatpush1.msra.mxu0 %v444
          %598 = vmatprep.subr.mxu0 0.0
          %599 = vmatpush1.msra.mxu0 %v443
          %600 = vmatprep.subr.mxu0 0.0
          %601 = vmatpush1.msra.mxu0 %v442
          %602 = vmatprep.subr.mxu0 0.0
          %603 = vmatpush1.msra.mxu0 %v441
          %604 = vmatprep.subr.mxu0 0.0
          %605 = vmatpush2.msra.mxu0 %v472
          %606 = vmatprep.subr.mxu0 0.0
          %607 = vmatpush2.msra.mxu0 %v471
          %608 = vmatprep.subr.mxu0 0.0
          %609 = vmatpush2.msra.mxu0 %v470
          %610 = vmatprep.subr.mxu0 0.0
          %611 = vmatpush2.msra.mxu0 %v469
          %612 = vmatprep.subr.mxu0 0.0
          %613 = vmatpush2.msra.mxu0 %v468
          %614 = vmatprep.subr.mxu0 0.0
          %615 = vmatpush2.msra.mxu0 %v467
          %616 = vmatprep.subr.mxu0 0.0
          %617 = vmatpush2.msra.mxu0 %v466
          %618 = vmatprep.subr.mxu0 0.0
          %619 = vmatpush2.msra.mxu0 %v465
          %620 = vmatprep.subr.mxu0 0.0
          %621 = vmatpush2.msra.mxu0 %v464
          %622 = vmatprep.subr.mxu0 0.0
          %623 = vmatpush2.msra.mxu0 %v463
          %624 = vmatprep.subr.mxu0 0.0
          %625 = vmatpush2.msra.mxu0 %v462
          %626 = vmatprep.subr.mxu0 0.0
          %627 = vmatpush2.msra.mxu0 %v461
          %628 = vmatprep.subr.mxu0 0.0
          %629 = vmatpush2.msra.mxu0 %v460
          %630 = vmatprep.subr.mxu0 0.0
          %631 = vmatpush2.msra.mxu0 %v459
          %632 = vmatprep.subr.mxu0 0.0
          %633 = vmatpush2.msra.mxu0 %v458
          %634 = vmatprep.subr.mxu0 0.0
          %635 = vmatpush2.msra.mxu0 %v457
          %636 = vmatprep.mubr.f32.mxu0 %v497
          %637 = vmatmul.mubr.f32.gmra.mxu0 %v495
          %v638 = vpop.f32.mrf.mxu0
          %v639 = vadd.f32 %v569, %v638
          %v640 = vpop.f32.mrf.mxu0
          %641 = vdwg.mxu0
          %v642 = vmax.f32 %v639, 0.0
          %v643 = vld [vmem:[#allocation8] sm:$0xff]
          %v644 = vld [vmem:[#allocation8 + $0x8] sm:$0xff]
          %v645 = vld [vmem:[#allocation8 + $0x10] sm:$0xff]
          %v646 = vld [vmem:[#allocation8 + $0x18] sm:$0xff]
          %v647 = vld [vmem:[#allocation8 + $0x20] sm:$0xff]
          %v648 = vld [vmem:[#allocation8 + $0x28] sm:$0xff]
          %v649 = vld [vmem:[#allocation8 + $0x30] sm:$0xff]
          %v650 = vld [vmem:[#allocation8 + $0x38] sm:$0xff]
          %v651 = vld [vmem:[#allocation8 + $0x40] sm:$0xff]
          %v652 = vld [vmem:[#allocation8 + $0x48] sm:$0xff]
          %v653 = vld [vmem:[#allocation8 + $0x50] sm:$0xff]
          %v654 = vld [vmem:[#allocation8 + $0x58] sm:$0xff]
          %v655 = vld [vmem:[#allocation8 + $0x60] sm:$0xff]
          %v656 = vld [vmem:[#allocation8 + $0x68] sm:$0xff]
          %v657 = vld [vmem:[#allocation8 + $0x70] sm:$0xff]
          %v658 = vld [vmem:[#allocation8 + $0x78] sm:$0xff]
          %v659 = vld [vmem:[%s4] sm:$0x1]
          %v661 = vlaneseq
          %v662 = vshrl.u32 %v661, 7
          %v663 = vsub.s32 0, %v662
          %v664 = vrot.slane %v659, %v663
          %666 = vmatprep.subr.mxu0 0.0
          %667 = vmatpush1.msra.mxu0 %v658
          %668 = vmatprep.subr.mxu0 0.0
          %669 = vmatpush1.msra.mxu0 %v657
          %670 = vmatprep.subr.mxu0 0.0
          %671 = vmatpush1.msra.mxu0 %v656
          %672 = vmatprep.subr.mxu0 0.0
          %673 = vmatpush1.msra.mxu0 %v655
          %674 = vmatprep.subr.mxu0 0.0
          %675 = vmatpush1.msra.mxu0 %v654
          %676 = vmatprep.subr.mxu0 0.0
          %677 = vmatpush1.msra.mxu0 %v653
          %678 = vmatprep.subr.mxu0 0.0
          %679 = vmatpush1.msra.mxu0 %v652
          %680 = vmatprep.subr.mxu0 0.0
          %681 = vmatpush1.msra.mxu0 %v651
          %682 = vmatprep.subr.mxu0 0.0
          %683 = vmatpush1.msra.mxu0 %v650
          %684 = vmatprep.subr.mxu0 0.0
          %685 = vmatpush1.msra.mxu0 %v649
          %686 = vmatprep.subr.mxu0 0.0
          %687 = vmatpush1.msra.mxu0 %v648
          %688 = vmatprep.subr.mxu0 0.0
          %689 = vmatpush1.msra.mxu0 %v647
          %690 = vmatprep.subr.mxu0 0.0
          %691 = vmatpush1.msra.mxu0 %v646
          %692 = vmatprep.subr.mxu0 0.0
          %693 = vmatpush1.msra.mxu0 %v645
          %694 = vmatprep.subr.mxu0 0.0
          %695 = vmatpush1.msra.mxu0 %v644
          %696 = vmatprep.subr.mxu0 0.0
          %697 = vmatpush1.msra.mxu0 %v643
          %698 = vmatprep.subr.mxu0 0.0
          %699 = vmatpush2.msra.mxu0 0.0
          %700 = vmatprep.subr.mxu0 0.0
          %701 = vmatpush2.msra.mxu0 0.0
          %702 = vmatprep.subr.mxu0 0.0
          %703 = vmatpush2.msra.mxu0 0.0
          %704 = vmatprep.subr.mxu0 0.0
          %705 = vmatpush2.msra.mxu0 0.0
          %706 = vmatprep.subr.mxu0 0.0
          %707 = vmatpush2.msra.mxu0 0.0
          %708 = vmatprep.subr.mxu0 0.0
          %709 = vmatpush2.msra.mxu0 0.0
          %710 = vmatprep.subr.mxu0 0.0
          %711 = vmatpush2.msra.mxu0 0.0
          %712 = vmatprep.subr.mxu0 0.0
          %713 = vmatpush2.msra.mxu0 0.0
          %714 = vmatprep.subr.mxu0 0.0
          %715 = vmatpush2.msra.mxu0 0.0
          %716 = vmatprep.subr.mxu0 0.0
          %717 = vmatpush2.msra.mxu0 0.0
          %718 = vmatprep.subr.mxu0 0.0
          %719 = vmatpush2.msra.mxu0 0.0
          %720 = vmatprep.subr.mxu0 0.0
          %721 = vmatpush2.msra.mxu0 0.0
          %722 = vmatprep.subr.mxu0 0.0
          %723 = vmatpush2.msra.mxu0 0.0
          %724 = vmatprep.subr.mxu0 0.0
          %725 = vmatpush2.msra.mxu0 0.0
          %726 = vmatprep.subr.mxu0 0.0
          %727 = vmatpush2.msra.mxu0 0.0
          %728 = vmatprep.subr.mxu0 0.0
          %729 = vmatpush2.msra.mxu0 0.0
          %730 = vmatprep.mubr.f32.mxu0 0.0
          %731 = vmatmul.mubr.f32.gmra.mxu0 %v642
          %v732 = vpop.f32.mrf.mxu0
          %v733 = vadd.f32 %v664, %v732
          %v734 = vpop.f32.mrf.mxu0
          %735 = vdwg.mxu0
          %736 = vst [vmem:[#allocation9] sm:$0x3] %v733
        $region60: #{tpu_custom_call.1} parent=39 // pred_fallthru
          _
        // Predicated region
        $region61: #{tpu_custom_call.1} parent=39 // pred_check
          %p737 = pneg %p163
        $region62: #{tpu_custom_call.1} parent=39 // pred_check_branch
          %739 = sbr.rel (%p737) target = $region64
        $region63: #{tpu_custom_call.1} parent=39 // pred_region
          %s741 = ssub.s32 32, 32
          %742 = vsyncadd [#allocation5], %s741
          %s743 = smul.addr %s25, 32
          %s744 = scalar_lea.hbm %s5, %s743
          %s746 = sshll.u32 [#allocation9], 4
          %s747 = int_to_ptr.vmem [resolvable:$true] %s746
          %749 = dma.vmem_to_hbm [thread:$0]  %s747, 32, %s744, [#allocation5]
        $region64: #{tpu_custom_call.1} parent=39 // pred_fallthru
          _
        // Predicated region
        $region65: #{tpu_custom_call.1} parent=39 // pred_check
          %p750 = pneg %p163
        $region66: #{tpu_custom_call.1} parent=39 // pred_check_branch
          %752 = sbr.rel (%p750) target = $region68
        $region67: #{tpu_custom_call.1} parent=39 // pred_region
          %753 = dma.done [#allocation5], 32
        $region68: #{tpu_custom_call.1} parent=39 // pred_fallthru
          _
      $region40: #{tpu_custom_call.1} parent=5 // pred_fallthru
        _
      %p754 = scmp.le.s32.totalorder 2, %s16
      // Predicated region
      $region69: #{tpu_custom_call.1} parent=5 // pred_check
        %p755 = pneg %p754
      $region70: #{tpu_custom_call.1} parent=5 // pred_check_branch
        %757 = sbr.rel (%p755) target = $region72
      $region71: #{tpu_custom_call.1} parent=5 // pred_region
        %s758 = ssub.s32 %s16, 2
      $region72: #{tpu_custom_call.1} parent=5 // pred_fallthru
        _
    $region6: #{tpu_custom_call.1} parent=1 // loop_footer
      %s20 = sadd.s32 1, %s16
    $region7: #{tpu_custom_call.1} parent=1 // loop_footer_branch
      %15 = sbr.rel target = $region3
    $region8: #{tpu_custom_call.1} parent=1 // loop_exit
      _
    %759 = vsyncpa [#allocation4], 1
    %s760 = scalar_lea.sflag [#allocation4], 1
    %761 = vsyncpa %s760, 1
    %762 = vsyncpa [#allocation7], 1
    %763 = vsyncpa [#allocation5], 1
    %s764 = scalar_lea.sflag [#allocation5], 1
    %765 = vsyncpa %s764, 1

</llo_original>
